<compile_context>
chip_gen: v6e
topology: v6e:2x2x1
jax: 0.10.0
libtpu: 0.0.40
codegen_flags: <defaults>
</compile_context>

<pallas_src>
import functools

import jax
import jax.numpy as jnp
from jax.experimental import pallas as pl
from jax.experimental.pallas import tpu as pltpu


def _round_up(x, m):
    return (x + m - 1) // m * m


# -----------------------------------------------------------------------------
# Targeted capability probes (real-kernel errors are never masked).
# -----------------------------------------------------------------------------
_PIPELINE_MODE_OK = None


def _probe_kernel(x_ref, o_ref):
    o_ref[...] = x_ref[...] + 1.0


def _pipeline_mode_supported():
    """True iff pl.BlockSpec(..., pipeline_mode=pl.Buffered(1)) compiles & runs."""
    global _PIPELINE_MODE_OK
    if _PIPELINE_MODE_OK is None:
        try:
            spec = pl.BlockSpec((8, 128), lambda i: (0, 0),
                                pipeline_mode=pl.Buffered(1))
            out = pl.pallas_call(
                _probe_kernel,
                out_shape=jax.ShapeDtypeStruct((8, 128), jnp.float32),
                grid=(1,),
                in_specs=[spec],
                out_specs=pl.BlockSpec((8, 128), lambda i: (0, 0)),
            )(jnp.zeros((8, 128), jnp.float32))
            jax.block_until_ready(out)
            _PIPELINE_MODE_OK = True
        except Exception:  # capability probe only
            _PIPELINE_MODE_OK = False
    return _PIPELINE_MODE_OK


def _vmem_capacity_bytes():
    try:
        return int(pltpu.get_tpu_info().vmem_capacity_bytes)
    except Exception:  # info query only; assume the smallest (v7x: 64 MiB/TC)
        return 64 << 20


def _spec(shape, index_map, nbuf=None):
    """BlockSpec with an optional explicit buffer count (when supported)."""
    if nbuf is not None and _pipeline_mode_supported():
        return pl.BlockSpec(shape, index_map, pipeline_mode=pl.Buffered(nbuf))
    return pl.BlockSpec(shape, index_map)


# -----------------------------------------------------------------------------
# Kernel
# -----------------------------------------------------------------------------
def midcoder_kernel(x_ref, b_enc_ref, W_enc_ref, W_mid_ref, b_mid_ref,
                    W_in_ref, b_in_ref, W_out_ref, b_mid_out_ref,
                    mlp_out_ref, gate_ref, mid_ref, acts_ref,
                    *scratch, stream_features):
    cdt = W_enc_ref.dtype  # MXU operand dtype (bf16 on the perf path)

    # acts = relu(x @ W_enc + b_enc_eff); b_dec already folded into b_enc_eff
    # and x already in the operand dtype (pre-cast in the wrapper).
    x = x_ref[...]
    acts = jnp.dot(x, W_enc_ref[...], preferred_element_type=jnp.float32)
    acts = jnp.maximum(acts + b_enc_ref[...], 0.0)            # f32
    acts_c = acts.astype(cdt)                                  # one cast, reused
    acts_ref[...] = (acts_c if acts_ref.dtype == acts_c.dtype
                     else acts.astype(acts_ref.dtype))

    def finish(mid1):
        # mid = mid1 @ W_in + b_in
        mid = jnp.dot(mid1.astype(cdt), W_in_ref[...],
                      preferred_element_type=jnp.float32) + b_in_ref[...]
        # gate * mid == relu(mid): feed relu(mid) straight to the MXU.
        masked = jnp.maximum(mid, 0.0)
        mlp = jnp.dot(masked.astype(cdt), W_out_ref[...],
                      preferred_element_type=jnp.float32) + b_mid_out_ref[...]
        mlp_out_ref[...] = mlp.astype(mlp_out_ref.dtype)
        gate_ref[...] = (mid > 0).astype(gate_ref.dtype)       # from f32 mid
        mid_ref[...] = mid.astype(mid_ref.dtype)

    if not stream_features:
        # Resident-weight path: the whole n_feat contraction in one step.
        mid1 = jnp.dot(acts_c, W_mid_ref[...],
                       preferred_element_type=jnp.float32) + b_mid_ref[...]
        finish(mid1)
    else:
        # Feature-streaming path: accumulate acts @ W_mid over n_feat chunks.
        (mid1_acc,) = scratch
        f = pl.program_id(1)

        @pl.when(f == 0)
        def _():
            mid1_acc[...] = jnp.zeros_like(mid1_acc)

        mid1_acc[...] += jnp.dot(acts_c, W_mid_ref[...],
                                 preferred_element_type=jnp.float32)

        @pl.when(f == pl.num_programs(1) - 1)
        def _():
            finish(mid1_acc[...] + b_mid_ref[...])


# -----------------------------------------------------------------------------
# Tiling / VMEM planner
# -----------------------------------------------------------------------------
def _plan(M, d_model, n_feat, d_mlp, tm, feat_tile, op_itemsize, out_itemsizes):
    cap = int(0.75 * _vmem_capacity_bytes())
    nbuf_const = 1 if _pipeline_mode_supported() else 2

    if tm is None:
        tm = 512 if cap >= (72 << 20) else 256          # bigger tiles on 128-MiB parts
    # >=2 row steps when possible so the "parallel" axis can shard across both
    # v7x TensorCores; 16-row alignment keeps bf16 blocks sublane-tile friendly.
    tm0 = min(_round_up(tm, 16), max(16, _round_up((M + 1) // 2, 16)))
    tm_cands = [tm0]
    if tm0 >= 256:
        tm_cands.append(tm0 // 2)

    if feat_tile is not None:
        assert n_feat % feat_tile == 0, "feat_tile must divide n_feat"
        tf_cands = [feat_tile]
    else:
        tf_cands = [n_feat]                              # resident first
        if n_feat % 128 == 0:
            t = n_feat
            while t > 128:
                t //= 2
                if t % 128 == 0 and n_feat % t == 0 and t not in tf_cands:
                    tf_cands.append(t)
            if 128 not in tf_cands:
                tf_cands.append(128)

    s_mlp, s_gate, s_mid, s_acts = out_itemsizes

    def estimate(tm_e, tf):
        nf = n_feat // tf
        nbuf_stream = nbuf_const if nf == 1 else 2
        x_b = 2 * tm_e * d_model * op_itemsize
        w_const = nbuf_const * 2 * d_model * d_mlp * op_itemsize    # W_in + W_out
        w_stream = nbuf_stream * 2 * d_model * tf * op_itemsize     # W_enc/W_mid chunk
        bias = nbuf_const * (3 * d_model + d_mlp) * 4 + nbuf_stream * tf * 4
        outs = 2 * tm_e * (d_model * s_mlp + d_mlp * (s_gate + s_mid) + tf * s_acts)
        scr = tm_e * d_model * 4 if nf > 1 else 0
        temps = tm_e * (2 * tf + 3 * d_mlp + 3 * d_model) * 4
        return int(1.25 * (x_b + w_const + w_stream + bias + outs + scr + temps)) \
            + (2 << 20)

    plan = None
    for tm_e in tm_cands:
        for tf in tf_cands:
            need = estimate(tm_e, tf)
            plan = (tm_e, tf, need)
            if need <= cap:
                return tm_e, tf, min(max(need, 16 << 20), cap)
    tm_e, tf, need = plan                                 # best effort
    return tm_e, tf, min(max(need, 16 << 20), cap)


# -----------------------------------------------------------------------------
# Wrapper
# -----------------------------------------------------------------------------
def midcoder_forward(inputs, params, *, tm=None, feat_tile=None,
                     matmul_dtype=jnp.bfloat16):
    """Pallas-TPU forward of Midcoder (cfg.mid_dim == 'd_model').

    inputs: (B, T, d_model) float32.  Returns (mlp_out, gate, mid, acts),
    all float32, matching the PyTorch module's forward."""
    B, T, d_model = inputs.shape
    M = B * T

    W_enc_f32 = params["W_enc"].astype(jnp.float32)        # (d_model, n_feat)
    n_feat = W_enc_f32.shape[1]
    d_mlp = params["W_in"].shape[1]

    # Weights pre-cast once to the MXU operand dtype.
    W_enc = W_enc_f32.astype(matmul_dtype)
    W_mid = params["W_mid"].astype(matmul_dtype)           # (n_feat, d_model)
    W_in = params["W_in"].astype(matmul_dtype)             # (d_model, d_mlp)
    W_out = params["W_out"].astype(matmul_dtype)           # (d_mlp, d_model)

    # Fold b_dec into the encoder bias (exact, f32):
    #   (x - b_dec) @ W_enc + b_enc == x @ W_enc + (b_enc - b_dec @ W_enc)
    b_enc_eff = (params["b_enc"].astype(jnp.float32)
                 - jnp.dot(params["b_dec"].astype(jnp.float32), W_enc_f32,
                           precision=jax.lax.Precision.HIGHEST)
                 ).reshape(1, n_feat)
    b_mid2 = params["b_mid"].astype(jnp.float32).reshape(1, d_model)
    b_in2 = params["b_in"].astype(jnp.float32).reshape(1, d_mlp)
    b_mid_out2 = params["b_mid_out"].astype(jnp.float32).reshape(1, d_model)

    # Narrow gate/mid/acts storage on the bf16 path; mlp_out stays f32.
    narrow = jnp.dtype(matmul_dtype) != jnp.dtype(jnp.float32)
    store_dt = jnp.bfloat16 if narrow else jnp.float32
    ssz = jnp.dtype(store_dt).itemsize
    op_sz = jnp.dtype(matmul_dtype).itemsize

    tm_eff, tf, vmem_limit = _plan(M, d_model, n_feat, d_mlp, tm, feat_tile,
                                   op_sz, (4, ssz, ssz, ssz))
    nf = n_feat // tf
    M_pad = _round_up(M, tm_eff)

    # x pre-cast to the operand dtype (halves the row-tile DMA on bf16), padded
    # to whole row tiles.
    x2d = inputs.reshape(M, d_model).astype(matmul_dtype)
    if M_pad != M:
        x2d = jnp.pad(x2d, ((0, M_pad - M), (0, 0)))

    grid = (M_pad // tm_eff, nf)
    const_nbuf = 1                          # grid-invariant operands
    stream_nbuf = 1 if nf == 1 else None    # None -> default double-buffering

    in_specs = [
        _spec((tm_eff, d_model), lambda i, f: (i, 0)),             # x
        _spec((1, tf), lambda i, f: (0, f), stream_nbuf),          # b_enc_eff
        _spec((d_model, tf), lambda i, f: (0, f), stream_nbuf),    # W_enc
        _spec((tf, d_model), lambda i, f: (f, 0), stream_nbuf),    # W_mid
        _spec((1, d_model), lambda i, f: (0, 0), const_nbuf),      # b_mid
        _spec((d_model, d_mlp), lambda i, f: (0, 0), const_nbuf),  # W_in
        _spec((1, d_mlp), lambda i, f: (0, 0), const_nbuf),        # b_in
        _spec((d_mlp, d_model), lambda i, f: (0, 0), const_nbuf),  # W_out
        _spec((1, d_model), lambda i, f: (0, 0), const_nbuf),      # b_mid_out
    ]
    out_specs = [
        pl.BlockSpec((tm_eff, d_model), lambda i, f: (i, 0)),      # mlp_out
        pl.BlockSpec((tm_eff, d_mlp), lambda i, f: (i, 0)),        # gate
        pl.BlockSpec((tm_eff, d_mlp), lambda i, f: (i, 0)),        # mid
        pl.BlockSpec((tm_eff, tf), lambda i, f: (i, f)),           # acts
    ]
    out_shapes = (
        jax.ShapeDtypeStruct((M_pad, d_model), jnp.float32),       # mlp_out
        jax.ShapeDtypeStruct((M_pad, d_mlp), store_dt),            # gate
        jax.ShapeDtypeStruct((M_pad, d_mlp), store_dt),            # mid
        jax.ShapeDtypeStruct((M_pad, n_feat), store_dt),           # acts
    )
    scratch_shapes = ([pltpu.VMEM((tm_eff, d_model), jnp.float32)]
                      if nf > 1 else [])

    flops = 4 * M_pad * d_model * (n_feat + d_mlp)
    w_bytes = 2 * d_model * (n_feat + d_mlp) * op_sz
    io_bytes = (M_pad * d_model * op_sz + M_pad * d_model * 4
                + M_pad * (2 * d_mlp + n_feat) * ssz)
    cost = pl.CostEstimate(flops=flops, transcendentals=0,
                           bytes_accessed=w_bytes + io_bytes)

    mlp_out, gate, mid, acts = pl.pallas_call(
        functools.partial(midcoder_kernel, stream_features=(nf > 1)),
        out_shape=out_shapes,
        grid_spec=pltpu.PrefetchScalarGridSpec(
            num_scalar_prefetch=0,
            grid=grid,
            in_specs=in_specs,
            out_specs=out_specs,
            scratch_shapes=scratch_shapes),
        compiler_params=pltpu.CompilerParams(
            dimension_semantics=("parallel", "arbitrary"),
            vmem_limit_bytes=vmem_limit),
        cost_estimate=cost,
    )(x2d, b_enc_eff, W_enc, W_mid, b_mid2, W_in, b_in2, W_out, b_mid_out2)

    def finalize(a, d):
        a = a[:M] if M_pad != M else a
        return a.astype(jnp.float32).reshape(B, T, d)

    return (finalize(mlp_out, d_model), finalize(gate, d_mlp),
            finalize(mid, d_mlp), finalize(acts, n_feat))


# -----------------------------------------------------------------------------
# Pure-JAX reference
# -----------------------------------------------------------------------------
def midcoder_forward_ref(inputs, params, *, matmul_dtype=jnp.float32,
                         fold_b_dec=False, store_dtype=None, precision=None):
    """Mirrors the PyTorch forward.  `fold_b_dec` / `store_dtype` let it mirror
    the kernel's exact operand-casting & output-storage rounding for tight
    checks; with both off it is the literal module semantics."""
    f32 = jnp.float32
    c = lambda a: a.astype(matmul_dtype)
    dot = lambda a, b: jnp.dot(c(a), c(b), preferred_element_type=f32,
                               precision=precision)
    x = inputs.astype(f32)
    if fold_b_dec:
        b_enc = (params["b_enc"].astype(f32)
                 - jnp.dot(params["b_dec"].astype(f32),
                           params["W_enc"].astype(f32),
                           precision=jax.lax.Precision.HIGHEST))
    else:
        x = x - params["b_dec"].astype(f32)
        b_enc = params["b_enc"].astype(f32)
    acts = jax.nn.relu(dot(x, params["W_enc"]) + b_enc)
    mid = dot(acts, params["W_mid"]) + params["b_mid"].astype(f32)
    mid = dot(mid, params["W_in"]) + params["b_in"].astype(f32)
    gate = (mid > 0).astype(f32)
    mlp_out = dot(gate * mid, params["W_out"]) + params["b_mid_out"].astype(f32)
    if store_dtype is not None:
        mid_o = mid.astype(store_dtype).astype(f32)
        acts_o = acts.astype(store_dtype).astype(f32)
    else:
        mid_o, acts_o = mid, acts
    return mlp_out, gate, mid_o, acts_o


def _check(outs, refs, atol, rtol):
    names = ("mlp_out", "gate", "mid", "acts")
    for name, o, r in zip(names, outs, refs):
        assert o.shape == r.shape, (name, o.shape, r.shape)
        if name == "gate":
            # 0/1 mask: tolerate vanishingly rare flips at mid == 0 caused by
            # accumulation-order differences.
            diff = float(jnp.mean(jnp.abs(o.astype(jnp.float32)
                                          - r.astype(jnp.float32))))
            assert diff < 1e-2, (name, diff)
        else:
            ok = bool(jnp.allclose(o, r, atol=atol, rtol=rtol))
            assert ok, (name, float(jnp.max(jnp.abs(o - r))))


if __name__ == "__main__":
    # Small deterministic shapes consistent with the module:
    #   inputs: (batch, pos, d_model); W_enc: (d_model, n_feat);
    #   W_mid: (n_feat, d_model); W_in: (d_model, d_mlp); W_out: (d_mlp, d_model)
    B, T, d_model, n_feat, d_mlp = 2, 8, 32, 64, 128

    key = jax.random.PRNGKey(0)
    ks = jax.random.split(key, 10)
    # NOTE: the PyTorch module initializes W_mid/b_mid/b_mid_out to zeros; small
    # random values are used so the kernel path is numerically non-trivial.
    params = {
        "b_dec":     jax.random.normal(ks[0], (d_model,), jnp.float32) * 0.1,
        "W_enc":     jax.random.normal(ks[1], (d_model, n_feat), jnp.float32) * 0.1,
        "b_enc":     jax.random.normal(ks[2], (n_feat,), jnp.float32) * 0.1,
        "W_mid":     jax.random.normal(ks[3], (n_feat, d_model), jnp.float32) * 0.1,
        "b_mid":     jax.random.normal(ks[4], (d_model,), jnp.float32) * 0.1,
        "W_in":      jax.random.normal(ks[5], (d_model, d_mlp), jnp.float32) * 0.1,
        "b_in":      jax.random.normal(ks[6], (d_mlp,), jnp.float32) * 0.1,
        "W_out":     jax.random.normal(ks[7], (d_mlp, d_model), jnp.float32) * 0.1,
        "b_mid_out": jax.random.normal(ks[8], (d_model,), jnp.float32) * 0.1,
    }
    inputs = jax.random.normal(ks[9], (B, T, d_model), jnp.float32)
    HI = jax.lax.Precision.HIGHEST

    # (A) algebraic check: folding b_dec into b_enc preserves module semantics.
    ref_plain = midcoder_forward_ref(inputs, params, matmul_dtype=jnp.float32,
                                     fold_b_dec=False, precision=HI)
    ref_fold = midcoder_forward_ref(inputs, params, matmul_dtype=jnp.float32,
                                    fold_b_dec=True, precision=HI)
    _check(ref_fold, ref_plain, atol=1e-5, rtol=1e-5)

    # (B) exact-precision kernel path: f32 operands, f32 outputs.
    outs_f32 = jax.block_until_ready(
        midcoder_forward(inputs, params, matmul_dtype=jnp.float32))
    refs_f32 = midcoder_forward_ref(inputs, params, matmul_dtype=jnp.float32,
                                    fold_b_dec=True)
    _check(outs_f32, refs_f32, atol=1e-4, rtol=1e-4)

    # (C) performance path: bf16 operands, f32 accumulation, bf16 storage of
    #     gate/mid/acts (upcast outside the kernel).
    outs_bf16 = jax.block_until_ready(
        midcoder_forward(inputs, params, matmul_dtype=jnp.bfloat16))
    refs_bf16 = midcoder_forward_ref(inputs, params, matmul_dtype=jnp.bfloat16,
                                     fold_b_dec=True, store_dtype=jnp.bfloat16)
    _check(outs_bf16, refs_bf16, atol=5e-3, rtol=5e-3)

    # (D) feature-streaming path: wider encoder, forced 128-wide n_feat chunks
    #     (exercises the "arbitrary" contraction axis + f32 accumulator).
    n_feat_big = 256
    params_big = dict(params)
    params_big["W_enc"] = jax.random.normal(
        ks[1], (d_model, n_feat_big), jnp.float32) * 0.1
    params_big["b_enc"] = jax.random.normal(
        ks[2], (n_feat_big,), jnp.float32) * 0.1
    params_big["W_mid"] = jax.random.normal(
        ks[3], (n_feat_big, d_model), jnp.float32) * 0.1
    outs_s = jax.block_until_ready(
        midcoder_forward(inputs, params_big, matmul_dtype=jnp.bfloat16,
                         feat_tile=128))
    refs_s = midcoder_forward_ref(inputs, params_big, matmul_dtype=jnp.bfloat16,
                                  fold_b_dec=True, store_dtype=jnp.bfloat16)
    _check(outs_s, refs_s, atol=5e-3, rtol=5e-3)

    print("KERNEL_OK")
</pallas_src>

<mosaic_0001>
module attributes {stable_mosaic.version = 11 : i64} {
  func.func @_probe_kernel(%arg0: i32, %arg1: memref<8x128xf32, #tpu.memory_space<vmem>>, %arg2: memref<8x128xf32, #tpu.memory_space<vmem>>) attributes {dimension_semantics = [#tpu.dimension_semantics<arbitrary>], iteration_bounds = array<i64: 1>, scalar_prefetch = 0 : i64, scratch_operands = 0 : i64, tpu.core_type = #tpu.core_type<tc>, window_params = [{pipeline_mode = #tpu.pipeline_mode<synchronous>, transform_indices = @transform_0, window_bounds = array<i64: 8, 128>}, {pipeline_mode = #tpu.pipeline_mode<synchronous>, transform_indices = @transform_1, window_bounds = array<i64: 8, 128>}]} {
    %c0 = arith.constant 0 : index
    %c0_0 = arith.constant 0 : index
    %0 = vector.load %arg1[%c0, %c0_0] : memref<8x128xf32, #tpu.memory_space<vmem>>, vector<8x128xf32>
    %cst = arith.constant 1.000000e+00 : f32
    %1 = vector.broadcast %cst : f32 to vector<8x128xf32>
    %2 = arith.addf %0, %1 : vector<8x128xf32>
    %c0_1 = arith.constant 0 : index
    %c0_2 = arith.constant 0 : index
    %3 = vector.load %arg2[%c0_1, %c0_2] : memref<8x128xf32, #tpu.memory_space<vmem>>, vector<8x128xf32>
    tpu.vector_store %arg2[%c0_1, %c0_2], %2 {strides = array<i32>} : memref<8x128xf32, #tpu.memory_space<vmem>>, vector<8x128xf32>,
    return
  }
  func.func @transform_0(%arg0: i32) -> (i32, i32) {
    %c0_i32 = arith.constant 0 : i32
    %c0_i32_0 = arith.constant 0 : i32
    %c0_i32_1 = arith.constant 0 : i32
    return %c0_i32, %c0_i32_0 : i32, i32
  }
  func.func @transform_1(%arg0: i32) -> (i32, i32) {
    %c0_i32 = arith.constant 0 : i32
    %c0_i32_0 = arith.constant 0 : i32
    %c0_i32_1 = arith.constant 0 : i32
    return %c0_i32, %c0_i32_0 : i32, i32
  }
}

module attributes {stable_mosaic.version = 11 : i64} {
  func.func @midcoder_kernel(%arg0: i32, %arg1: i32, %arg2: memref<16x32xf32, #tpu.memory_space<vmem>>, %arg3: memref<1x64xf32, #tpu.memory_space<vmem>>, %arg4: memref<32x64xf32, #tpu.memory_space<vmem>>, %arg5: memref<64x32xf32, #tpu.memory_space<vmem>>, %arg6: memref<1x32xf32, #tpu.memory_space<vmem>>, %arg7: memref<32x128xf32, #tpu.memory_space<vmem>>, %arg8: memref<1x128xf32, #tpu.memory_space<vmem>>, %arg9: memref<128x32xf32, #tpu.memory_space<vmem>>, %arg10: memref<1x32xf32, #tpu.memory_space<vmem>>, %arg11: memref<16x32xf32, #tpu.memory_space<vmem>>, %arg12: memref<16x128xf32, #tpu.memory_space<vmem>>, %arg13: memref<16x128xf32, #tpu.memory_space<vmem>>, %arg14: memref<16x64xf32, #tpu.memory_space<vmem>>) attributes {dimension_semantics = [#tpu.dimension_semantics<parallel>, #tpu.dimension_semantics<arbitrary>], iteration_bounds = array<i64: 1, 1>, scalar_prefetch = 0 : i64, scratch_operands = 0 : i64, tpu.core_type = #tpu.core_type<tc>, window_params = [{transform_indices = @transform_0, window_bounds = array<i64: 16, 32>}, {transform_indices = @transform_1, window_bounds = array<i64: 1, 64>}, {transform_indices = @transform_2, window_bounds = array<i64: 32, 64>}, {transform_indices = @transform_3, window_bounds = array<i64: 64, 32>}, {pipeline_mode = #tpu.pipeline_mode<synchronous>, transform_indices = @transform_4, window_bounds = array<i64: 1, 32>}, {pipeline_mode = #tpu.pipeline_mode<synchronous>, transform_indices = @transform_5, window_bounds = array<i64: 32, 128>}, {pipeline_mode = #tpu.pipeline_mode<synchronous>, transform_indices = @transform_6, window_bounds = array<i64: 1, 128>}, {pipeline_mode = #tpu.pipeline_mode<synchronous>, transform_indices = @transform_7, window_bounds = array<i64: 128, 32>}, {pipeline_mode = #tpu.pipeline_mode<synchronous>, transform_indices = @transform_8, window_bounds = array<i64: 1, 32>}, {transform_indices = @transform_9, window_bounds = array<i64: 16, 32>}, {transform_indices = @transform_10, window_bounds = array<i64: 16, 128>}, {transform_indices = @transform_11, window_bounds = array<i64: 16, 128>}, {transform_indices = @transform_12, window_bounds = array<i64: 16, 64>}]} {
    %c0 = arith.constant 0 : index
    %c0_0 = arith.constant 0 : index
    %0 = vector.load %arg2[%c0, %c0_0] : memref<16x32xf32, #tpu.memory_space<vmem>>, vector<16x32xf32>
    %c0_1 = arith.constant 0 : index
    %c0_2 = arith.constant 0 : index
    %1 = vector.load %arg4[%c0_1, %c0_2] : memref<32x64xf32, #tpu.memory_space<vmem>>, vector<32x64xf32>
    %cst = arith.constant dense<0.000000e+00> : vector<16x64xf32>
    %2 = tpu.matmul %0, %1, %cst {dimension_numbers = #tpu.dot_dimension_numbers<[1], [0], [0], [1], [0, 0, 1, 1], [], []>} : vector<16x32xf32>, vector<32x64xf32>, vector<16x64xf32> -> vector<16x64xf32>
    %c0_3 = arith.constant 0 : index
    %c0_4 = arith.constant 0 : index
    %3 = vector.load %arg3[%c0_3, %c0_4] : memref<1x64xf32, #tpu.memory_space<vmem>>, vector<1x64xf32>
    %4 = vector.broadcast %3 : vector<1x64xf32> to vector<16x64xf32>
    %5 = arith.addf %2, %4 : vector<16x64xf32>
    %cst_5 = arith.constant 0.000000e+00 : f32
    %6 = vector.broadcast %cst_5 : f32 to vector<16x64xf32>
    %7 = arith.maximumf %5, %6 : vector<16x64xf32>
    %c0_6 = arith.constant 0 : index
    %c0_7 = arith.constant 0 : index
    %8 = vector.load %arg14[%c0_6, %c0_7] : memref<16x64xf32, #tpu.memory_space<vmem>>, vector<16x64xf32>
    tpu.vector_store %arg14[%c0_6, %c0_7], %7 {strides = array<i32>} : memref<16x64xf32, #tpu.memory_space<vmem>>, vector<16x64xf32>,
    %c0_8 = arith.constant 0 : index
    %c0_9 = arith.constant 0 : index
    %9 = vector.load %arg5[%c0_8, %c0_9] : memref<64x32xf32, #tpu.memory_space<vmem>>, vector<64x32xf32>
    %cst_10 = arith.constant dense<0.000000e+00> : vector<16x32xf32>
    %10 = tpu.matmul %7, %9, %cst_10 {dimension_numbers = #tpu.dot_dimension_numbers<[1], [0], [0], [1], [0, 0, 1, 1], [], []>} : vector<16x64xf32>, vector<64x32xf32>, vector<16x32xf32> -> vector<16x32xf32>
    %c0_11 = arith.constant 0 : index
    %c0_12 = arith.constant 0 : index
    %11 = vector.load %arg6[%c0_11, %c0_12] : memref<1x32xf32, #tpu.memory_space<vmem>>, vector<1x32xf32>
    %12 = vector.broadcast %11 : vector<1x32xf32> to vector<16x32xf32>
    %13 = arith.addf %10, %12 : vector<16x32xf32>
    %c0_13 = arith.constant 0 : index
    %c0_14 = arith.constant 0 : index
    %14 = vector.load %arg7[%c0_13, %c0_14] : memref<32x128xf32, #tpu.memory_space<vmem>>, vector<32x128xf32>
    %cst_15 = arith.constant dense<0.000000e+00> : vector<16x128xf32>
    %15 = tpu.matmul %13, %14, %cst_15 {dimension_numbers = #tpu.dot_dimension_numbers<[1], [0], [0], [1], [0, 0, 1, 1], [], []>} : vector<16x32xf32>, vector<32x128xf32>, vector<16x128xf32> -> vector<16x128xf32>
    %c0_16 = arith.constant 0 : index
    %c0_17 = arith.constant 0 : index
    %16 = vector.load %arg8[%c0_16, %c0_17] : memref<1x128xf32, #tpu.memory_space<vmem>>, vector<1x128xf32>
    %17 = vector.broadcast %16 : vector<1x128xf32> to vector<16x128xf32>
    %18 = arith.addf %15, %17 : vector<16x128xf32>
    %cst_18 = arith.constant 0.000000e+00 : f32
    %19 = vector.broadcast %cst_18 : f32 to vector<16x128xf32>
    %20 = arith.maximumf %18, %19 : vector<16x128xf32>
    %c0_19 = arith.constant 0 : index
    %c0_20 = arith.constant 0 : index
    %21 = vector.load %arg9[%c0_19, %c0_20] : memref<128x32xf32, #tpu.memory_space<vmem>>, vector<128x32xf32>
    %cst_21 = arith.constant dense<0.000000e+00> : vector<16x32xf32>
    %22 = tpu.matmul %20, %21, %cst_21 {dimension_numbers = #tpu.dot_dimension_numbers<[1], [0], [0], [1], [0, 0, 1, 1], [], []>} : vector<16x128xf32>, vector<128x32xf32>, vector<16x32xf32> -> vector<16x32xf32>
    %c0_22 = arith.constant 0 : index
    %c0_23 = arith.constant 0 : index
    %23 = vector.load %arg10[%c0_22, %c0_23] : memref<1x32xf32, #tpu.memory_space<vmem>>, vector<1x32xf32>
    %24 = vector.broadcast %23 : vector<1x32xf32> to vector<16x32xf32>
    %25 = arith.addf %22, %24 : vector<16x32xf32>
    %c0_24 = arith.constant 0 : index
    %c0_25 = arith.constant 0 : index
    %26 = vector.load %arg11[%c0_24, %c0_25] : memref<16x32xf32, #tpu.memory_space<vmem>>, vector<16x32xf32>
    tpu.vector_store %arg11[%c0_24, %c0_25], %25 {strides = array<i32>} : memref<16x32xf32, #tpu.memory_space<vmem>>, vector<16x32xf32>,
    %cst_26 = arith.constant 0.000000e+00 : f32
    %27 = vector.broadcast %cst_26 : f32 to vector<16x128xf32>
    %28 = arith.cmpf ogt, %18, %27 : vector<16x128xf32>
    %29 = arith.extui %28 : vector<16x128xi1> to vector<16x128xi32>
    %30 = arith.sitofp %29 : vector<16x128xi32> to vector<16x128xf32>
    %c0_27 = arith.constant 0 : index
    %c0_28 = arith.constant 0 : index
    %31 = vector.load %arg12[%c0_27, %c0_28] : memref<16x128xf32, #tpu.memory_space<vmem>>, vector<16x128xf32>
    tpu.vector_store %arg12[%c0_27, %c0_28], %30 {strides = array<i32>} : memref<16x128xf32, #tpu.memory_space<vmem>>, vector<16x128xf32>,
    %c0_29 = arith.constant 0 : index
    %c0_30 = arith.constant 0 : index
    %32 = vector.load %arg13[%c0_29, %c0_30] : memref<16x128xf32, #tpu.memory_space<vmem>>, vector<16x128xf32>
    tpu.vector_store %arg13[%c0_29, %c0_30], %18 {strides = array<i32>} : memref<16x128xf32, #tpu.memory_space<vmem>>, vector<16x128xf32>,
    return
  }
  func.func @transform_0(%arg0: i32, %arg1: i32) -> (i32, i32) {
    %c0_i32 = arith.constant 0 : i32
    %c0_i32_0 = arith.constant 0 : i32
    return %arg0, %c0_i32 : i32, i32
  }
  func.func @transform_1(%arg0: i32, %arg1: i32) -> (i32, i32) {
    %c0_i32 = arith.constant 0 : i32
    %c0_i32_0 = arith.constant 0 : i32
    return %c0_i32, %arg1 : i32, i32
  }
  func.func @transform_2(%arg0: i32, %arg1: i32) -> (i32, i32) {
    %c0_i32 = arith.constant 0 : i32
    %c0_i32_0 = arith.constant 0 : i32
    return %c0_i32, %arg1 : i32, i32
  }
  func.func @transform_3(%arg0: i32, %arg1: i32) -> (i32, i32) {
    %c0_i32 = arith.constant 0 : i32
    %c0_i32_0 = arith.constant 0 : i32
    return %arg1, %c0_i32 : i32, i32
  }
  func.func @transform_4(%arg0: i32, %arg1: i32) -> (i32, i32) {
    %c0_i32 = arith.constant 0 : i32
    %c0_i32_0 = arith.constant 0 : i32
    %c0_i32_1 = arith.constant 0 : i32
    return %c0_i32, %c0_i32_0 : i32, i32
  }
  func.func @transform_5(%arg0: i32, %arg1: i32) -> (i32, i32) {
    %c0_i32 = arith.constant 0 : i32
    %c0_i32_0 = arith.constant 0 : i32
    %c0_i32_1 = arith.constant 0 : i32
    return %c0_i32, %c0_i32_0 : i32, i32
  }
  func.func @transform_6(%arg0: i32, %arg1: i32) -> (i32, i32) {
    %c0_i32 = arith.constant 0 : i32
    %c0_i32_0 = arith.constant 0 : i32
    %c0_i32_1 = arith.constant 0 : i32
    return %c0_i32, %c0_i32_0 : i32, i32
  }
  func.func @transform_7(%arg0: i32, %arg1: i32) -> (i32, i32) {
    %c0_i32 = arith.constant 0 : i32
    %c0_i32_0 = arith.constant 0 : i32
    %c0_i32_1 = arith.constant 0 : i32
    return %c0_i32, %c0_i32_0 : i32, i32
  }
  func.func @transform_8(%arg0: i32, %arg1: i32) -> (i32, i32) {
    %c0_i32 = arith.constant 0 : i32
    %c0_i32_0 = arith.constant 0 : i32
    %c0_i32_1 = arith.constant 0 : i32
    return %c0_i32, %c0_i32_0 : i32, i32
  }
  func.func @transform_9(%arg0: i32, %arg1: i32) -> (i32, i32) {
    %c0_i32 = arith.constant 0 : i32
    %c0_i32_0 = arith.constant 0 : i32
    return %arg0, %c0_i32 : i32, i32
  }
  func.func @transform_10(%arg0: i32, %arg1: i32) -> (i32, i32) {
    %c0_i32 = arith.constant 0 : i32
    %c0_i32_0 = arith.constant 0 : i32
    return %arg0, %c0_i32 : i32, i32
  }
  func.func @transform_11(%arg0: i32, %arg1: i32) -> (i32, i32) {
    %c0_i32 = arith.constant 0 : i32
    %c0_i32_0 = arith.constant 0 : i32
    return %arg0, %c0_i32 : i32, i32
  }
  func.func @transform_12(%arg0: i32, %arg1: i32) -> (i32, i32) {
    %c0_i32 = arith.constant 0 : i32
    return %arg0, %arg1 : i32, i32
  }
}

</mosaic_0001>

<llo_original>
// kernel: tpu_custom_call.1
$region0: #{tpu_custom_call.1}
  #allocation0 [shape = 'u32[]', space=smem, size = 0x4, offset = 0x4, fixed_abs, tag = 'smem constant byte address 0x4 - core index']
  #allocation1 [shape = 'u32[144,128]{1,0:T(1,128)}', space=vmem, size = 0x12000, scoped, tag = 'internal scratch']
  %s0 = inlined_call_operand.hbm [shape: f32[8,128], index: 0, kind: input, shape index: {}]
  %s1 = inlined_call_operand.hbm [shape: f32[8,128], index: 1, kind: output, shape index: {}]
  %s2 = sld [smem:[#allocation0]]
  $region18: #{tpu_custom_call.1} parent=0
    _
  %s4 = ssub.s32 1, %s2
  %s5 = scalar_select 0, %s4, %s2
  $region1: #{tpu_custom_call.1} parent=0
    #allocation2 [shape = 'u8[4096]{0}', space=vmem, size = 0x1000, scoped, tag = 'input window, operand 0, single buffered']
    #allocation3 [shape = 's32[1]{0}', space=sflag, size = 0x4, scoped, tag = 'scoped memory for tpu_custom_call.1']
    #allocation4 [shape = 's32[1]{0}', space=sflag, size = 0x4, scoped, tag = 'scoped memory for tpu_custom_call.1']
    #allocation5 [shape = 'u8[4096]{0}', space=vmem, size = 0x1000, scoped, tag = 'output window, operand 0, single buffered']
    %6 = vsyncpa [#allocation3], 0
    %7 = vsyncpa [#allocation4], 0
    // Predicated region
    $region2: #{tpu_custom_call.1} parent=1 // pred_check
      _
    $region3: #{tpu_custom_call.1} parent=1 // pred_check_branch
      %9 = sbr.rel (0) target = $region5
    $region4: #{tpu_custom_call.1} parent=1 // pred_region
      %s11 = ssub.s32 128, 128
      %12 = vsyncadd [#allocation3], %s11
      %s14 = sshll.u32 [#allocation2], 4
      %s15 = int_to_ptr.vmem [resolvable:$true] %s14
      %17 = dma.hbm_to_vmem [thread:$0]  %s0, 128, %s15, [#allocation3]
    $region5: #{tpu_custom_call.1} parent=1 // pred_fallthru
      _
    // Predicated region
    $region6: #{tpu_custom_call.1} parent=1 // pred_check
      _
    $region7: #{tpu_custom_call.1} parent=1 // pred_check_branch
      %19 = sbr.rel (0) target = $region9
    $region8: #{tpu_custom_call.1} parent=1 // pred_region
      %20 = dma.done [#allocation3], 128
    $region9: #{tpu_custom_call.1} parent=1 // pred_fallthru
      _
    %v21 = vld [vmem:[#allocation2] sm:$0xff]
    %v22 = vadd.f32 %v21, 1.0
    %23 = vst [vmem:[#allocation5] sm:$0xff] %v22
    // Predicated region
    $region10: #{tpu_custom_call.1} parent=1 // pred_check
      _
    $region11: #{tpu_custom_call.1} parent=1 // pred_check_branch
      %25 = sbr.rel (0) target = $region13
    $region12: #{tpu_custom_call.1} parent=1 // pred_region
      %s27 = ssub.s32 128, 128
      %28 = vsyncadd [#allocation4], %s27
      %s30 = sshll.u32 [#allocation5], 4
      %s31 = int_to_ptr.vmem [resolvable:$true] %s30
      %33 = dma.vmem_to_hbm [thread:$0]  %s31, 128, %s1, [#allocation4]
    $region13: #{tpu_custom_call.1} parent=1 // pred_fallthru
      _
    // Predicated region
    $region14: #{tpu_custom_call.1} parent=1 // pred_check
      _
    $region15: #{tpu_custom_call.1} parent=1 // pred_check_branch
      %35 = sbr.rel (0) target = $region17
    $region16: #{tpu_custom_call.1} parent=1 // pred_region
      %36 = dma.done [#allocation4], 128
    $region17: #{tpu_custom_call.1} parent=1 // pred_fallthru
      _
    %37 = vsyncpa [#allocation3], 1
    %38 = vsyncpa [#allocation4], 1

// kernel: tpu_custom_call.1
$region0: #{tpu_custom_call.1}
  #allocation0 [shape = 'u32[]', space=smem, size = 0x4, offset = 0x4, fixed_abs, tag = 'smem constant byte address 0x4 - core index']
  #allocation1 [shape = 'u32[144,128]{1,0:T(1,128)}', space=vmem, size = 0x12000, scoped, tag = 'internal scratch']
  %s0 = inlined_call_operand.vmem [shape: f32[16,32], index: 0, kind: input, shape index: {}]
  %s1 = inlined_call_operand.vmem [shape: f32[1,64], index: 1, kind: input, shape index: {}]
  %s2 = inlined_call_operand.vmem [shape: f32[32,64], index: 2, kind: input, shape index: {}]
  %s3 = inlined_call_operand.vmem [shape: f32[64,32], index: 3, kind: input, shape index: {}]
  %s4 = inlined_call_operand.vmem [shape: f32[1,32], index: 4, kind: input, shape index: {}]
  %s5 = inlined_call_operand.vmem [shape: f32[32,128], index: 5, kind: input, shape index: {}]
  %s6 = inlined_call_operand.vmem [shape: f32[1,128], index: 6, kind: input, shape index: {}]
  %s7 = inlined_call_operand.vmem [shape: f32[128,32], index: 7, kind: input, shape index: {}]
  %s8 = inlined_call_operand.vmem [shape: f32[1,32], index: 8, kind: input, shape index: {}]
  %s9 = inlined_call_operand.hbm [shape: f32[16,32], index: 9, kind: output, shape index: {0}]
  %s10 = inlined_call_operand.hbm [shape: f32[16,128], index: 10, kind: output, shape index: {1}]
  %s11 = inlined_call_operand.hbm [shape: f32[16,128], index: 11, kind: output, shape index: {2}]
  %s12 = inlined_call_operand.hbm [shape: f32[16,64], index: 12, kind: output, shape index: {3}]
  %13 = xla_tuple %s9, %s10, %s11, %s12
  %s14 = sld [smem:[#allocation0]]
  $region70: #{tpu_custom_call.1} parent=0
    _
  %s16 = ssub.s32 1, %s14
  %s17 = scalar_select 0, %s16, %s14
  $region1: #{tpu_custom_call.1} parent=0
    #allocation2 [shape = 'u8[8192]{0}', space=vmem, size = 0x2000, scoped, tag = 'output window, operand 0, single buffered']
    #allocation3 [shape = 's32[1]{0}', space=sflag, size = 0x4, scoped, tag = 'scoped memory for tpu_custom_call.1']
    #allocation4 [shape = 'u8[8192]{0}', space=vmem, size = 0x2000, scoped, tag = 'output window, operand 1, single buffered']
    #allocation5 [shape = 's32[1]{0}', space=sflag, size = 0x4, scoped, tag = 'scoped memory for tpu_custom_call.1']
    #allocation6 [shape = 'u8[8192]{0}', space=vmem, size = 0x2000, scoped, tag = 'output window, operand 2, single buffered']
    #allocation7 [shape = 'u8[8192]{0}', space=vmem, size = 0x2000, scoped, tag = 'output window, operand 3, single buffered']
    #allocation8 [shape = 's32[1]{0}', space=sflag, size = 0x4, scoped, tag = 'scoped memory for tpu_custom_call.1']
    %18 = vsyncpa [#allocation3], 0
    %19 = vsyncpa [#allocation5], 0
    %20 = vsyncpa [#allocation8], 0
    // Predicated region
    $region2: #{tpu_custom_call.1} parent=1 // pred_check
      _
    $region3: #{tpu_custom_call.1} parent=1 // pred_check_branch
      %22 = sbr.rel (0) target = $region5
    $region4: #{tpu_custom_call.1} parent=1 // pred_region
      _
    $region5: #{tpu_custom_call.1} parent=1 // pred_fallthru
      _
    // Predicated region
    $region6: #{tpu_custom_call.1} parent=1 // pred_check
      _
    $region7: #{tpu_custom_call.1} parent=1 // pred_check_branch
      %24 = sbr.rel (0) target = $region9
    $region8: #{tpu_custom_call.1} parent=1 // pred_region
      _
    $region9: #{tpu_custom_call.1} parent=1 // pred_fallthru
      _
    // Predicated region
    $region10: #{tpu_custom_call.1} parent=1 // pred_check
      _
    $region11: #{tpu_custom_call.1} parent=1 // pred_check_branch
      %26 = sbr.rel (0) target = $region13
    $region12: #{tpu_custom_call.1} parent=1 // pred_region
      _
    $region13: #{tpu_custom_call.1} parent=1 // pred_fallthru
      _
    // Predicated region
    $region14: #{tpu_custom_call.1} parent=1 // pred_check
      _
    $region15: #{tpu_custom_call.1} parent=1 // pred_check_branch
      %28 = sbr.rel (0) target = $region17
    $region16: #{tpu_custom_call.1} parent=1 // pred_region
      _
    $region17: #{tpu_custom_call.1} parent=1 // pred_fallthru
      _
    // Predicated region
    $region18: #{tpu_custom_call.1} parent=1 // pred_check
      _
    $region19: #{tpu_custom_call.1} parent=1 // pred_check_branch
      %30 = sbr.rel (0) target = $region21
    $region20: #{tpu_custom_call.1} parent=1 // pred_region
      _
    $region21: #{tpu_custom_call.1} parent=1 // pred_fallthru
      _
    // Predicated region
    $region22: #{tpu_custom_call.1} parent=1 // pred_check
      _
    $region23: #{tpu_custom_call.1} parent=1 // pred_check_branch
      %32 = sbr.rel (0) target = $region25
    $region24: #{tpu_custom_call.1} parent=1 // pred_region
      _
    $region25: #{tpu_custom_call.1} parent=1 // pred_fallthru
      _
    // Predicated region
    $region26: #{tpu_custom_call.1} parent=1 // pred_check
      _
    $region27: #{tpu_custom_call.1} parent=1 // pred_check_branch
      %34 = sbr.rel (0) target = $region29
    $region28: #{tpu_custom_call.1} parent=1 // pred_region
      _
    $region29: #{tpu_custom_call.1} parent=1 // pred_fallthru
      _
    // Predicated region
    $region30: #{tpu_custom_call.1} parent=1 // pred_check
      _
    $region31: #{tpu_custom_call.1} parent=1 // pred_check_branch
      %36 = sbr.rel (0) target = $region33
    $region32: #{tpu_custom_call.1} parent=1 // pred_region
      _
    $region33: #{tpu_custom_call.1} parent=1 // pred_fallthru
      _
    // Predicated region
    $region34: #{tpu_custom_call.1} parent=1 // pred_check
      _
    $region35: #{tpu_custom_call.1} parent=1 // pred_check_branch
      %38 = sbr.rel (0) target = $region37
    $region36: #{tpu_custom_call.1} parent=1 // pred_region
      _
    $region37: #{tpu_custom_call.1} parent=1 // pred_fallthru
      _
    %v39 = vld [vmem:[%s0] sm:$0xff]
    %v40 = vld [vmem:[%s0 + $0x8] sm:$0xff]
    %v41 = vld [vmem:[%s2] sm:$0xff]
    %v42 = vld [vmem:[%s2 + $0x8] sm:$0xff]
    %v43 = vld [vmem:[%s2 + $0x10] sm:$0xff]
    %v44 = vld [vmem:[%s2 + $0x18] sm:$0xff]
    %v45 = vld [vmem:[%s1] sm:$0x1]
    %v47 = vlaneseq
    %v48 = vshrl.u32 %v47, 7
    %v49 = vsub.s32 0, %v48
    %v50 = vrot.slane %v45, %v49
    %vm52 = vcmask 261120
    %v54 = vsel %vm52, %v39, 0
    %v57 = vsel %vm52, %v40, 0
    %59 = vmatprep.subr.mxu0 0.0
    %60 = vmatpush1.msra.mxu0 0.0
    %61 = vmatprep.subr.mxu0 0.0
    %62 = vmatpush1.msra.mxu0 0.0
    %63 = vmatprep.subr.mxu0 0.0
    %64 = vmatpush1.msra.mxu0 0.0
    %65 = vmatprep.subr.mxu0 0.0
    %66 = vmatpush1.msra.mxu0 0.0
    %67 = vmatprep.subr.mxu0 0.0
    %68 = vmatpush1.msra.mxu0 0.0
    %69 = vmatprep.subr.mxu0 0.0
    %70 = vmatpush1.msra.mxu0 0.0
    %71 = vmatprep.subr.mxu0 0.0
    %72 = vmatpush1.msra.mxu0 0.0
    %73 = vmatprep.subr.mxu0 0.0
    %74 = vmatpush1.msra.mxu0 0.0
    %75 = vmatprep.subr.mxu0 0.0
    %76 = vmatpush1.msra.mxu0 0.0
    %77 = vmatprep.subr.mxu0 0.0
    %78 = vmatpush1.msra.mxu0 0.0
    %79 = vmatprep.subr.mxu0 0.0
    %80 = vmatpush1.msra.mxu0 0.0
    %81 = vmatprep.subr.mxu0 0.0
    %82 = vmatpush1.msra.mxu0 0.0
    %83 = vmatprep.subr.mxu0 0.0
    %84 = vmatpush1.msra.mxu0 %v44
    %85 = vmatprep.subr.mxu0 0.0
    %86 = vmatpush1.msra.mxu0 %v43
    %87 = vmatprep.subr.mxu0 0.0
    %88 = vmatpush1.msra.mxu0 %v42
    %89 = vmatprep.subr.mxu0 0.0
    %90 = vmatpush1.msra.mxu0 %v41
    %91 = vmatprep.subr.mxu0 0.0
    %92 = vmatpush2.msra.mxu0 0.0
    %93 = vmatprep.subr.mxu0 0.0
    %94 = vmatpush2.msra.mxu0 0.0
    %95 = vmatprep.subr.mxu0 0.0
    %96 = vmatpush2.msra.mxu0 0.0
    %97 = vmatprep.subr.mxu0 0.0
    %98 = vmatpush2.msra.mxu0 0.0
    %99 = vmatprep.subr.mxu0 0.0
    %100 = vmatpush2.msra.mxu0 0.0
    %101 = vmatprep.subr.mxu0 0.0
    %102 = vmatpush2.msra.mxu0 0.0
    %103 = vmatprep.subr.mxu0 0.0
    %104 = vmatpush2.msra.mxu0 0.0
    %105 = vmatprep.subr.mxu0 0.0
    %106 = vmatpush2.msra.mxu0 0.0
    %107 = vmatprep.subr.mxu0 0.0
    %108 = vmatpush2.msra.mxu0 0.0
    %109 = vmatprep.subr.mxu0 0.0
    %110 = vmatpush2.msra.mxu0 0.0
    %111 = vmatprep.subr.mxu0 0.0
    %112 = vmatpush2.msra.mxu0 0.0
    %113 = vmatprep.subr.mxu0 0.0
    %114 = vmatpush2.msra.mxu0 0.0
    %115 = vmatprep.subr.mxu0 0.0
    %116 = vmatpush2.msra.mxu0 0.0
    %117 = vmatprep.subr.mxu0 0.0
    %118 = vmatpush2.msra.mxu0 0.0
    %119 = vmatprep.subr.mxu0 0.0
    %120 = vmatpush2.msra.mxu0 0.0
    %121 = vmatprep.subr.mxu0 0.0
    %122 = vmatpush2.msra.mxu0 0.0
    %123 = vmatprep.mubr.f32.mxu0 0.0
    %124 = vmatmul.mubr.f32.gmra.mxu0 %v54
    %v125 = vpop.f32.mrf.mxu0
    %v126 = vadd.f32 %v50, %v125
    %v127 = vpop.f32.mrf.mxu0
    %128 = vmatprep.mubr.f32.mxu0 0.0
    %129 = vmatmul.mubr.f32.gmra.mxu0 %v57
    %v130 = vpop.f32.mrf.mxu0
    %v131 = vadd.f32 %v50, %v130
    %v132 = vpop.f32.mrf.mxu0
    %133 = vdwg.mxu0
    %v134 = vmax.f32 %v126, 0.0
    %v135 = vmax.f32 %v131, 0.0
    %vm136 = vcmask 523264
    %137 = vst.msk [vmem:[#allocation7] sm:$0xff] %vm136, %v134
    %138 = vst.msk [vmem:[#allocation7 + $0x8] sm:$0xff] %vm136, %v135
    %v139 = vld [vmem:[%s3] sm:$0xff]
    %v140 = vld [vmem:[%s3 + $0x8] sm:$0xff]
    %v141 = vld [vmem:[%s3 + $0x10] sm:$0xff]
    %v142 = vld [vmem:[%s3 + $0x18] sm:$0xff]
    %v143 = vld [vmem:[%s3 + $0x20] sm:$0xff]
    %v144 = vld [vmem:[%s3 + $0x28] sm:$0xff]
    %v145 = vld [vmem:[%s3 + $0x30] sm:$0xff]
    %v146 = vld [vmem:[%s3 + $0x38] sm:$0xff]
    %v147 = vld [vmem:[%s4] sm:$0x1]
    %v149 = vlaneseq
    %v150 = vshrl.u32 %v149, 7
    %v151 = vsub.s32 0, %v150
    %v152 = vrot.slane %v147, %v151
    %v155 = vsel %vm136, %v134, 0
    %v158 = vsel %vm136, %v135, 0
    %160 = vmatprep.subr.mxu0 0.0
    %161 = vmatpush1.msra.mxu0 0.0
    %162 = vmatprep.subr.mxu0 0.0
    %163 = vmatpush1.msra.mxu0 0.0
    %164 = vmatprep.subr.mxu0 0.0
    %165 = vmatpush1.msra.mxu0 0.0
    %166 = vmatprep.subr.mxu0 0.0
    %167 = vmatpush1.msra.mxu0 0.0
    %168 = vmatprep.subr.mxu0 0.0
    %169 = vmatpush1.msra.mxu0 0.0
    %170 = vmatprep.subr.mxu0 0.0
    %171 = vmatpush1.msra.mxu0 0.0
    %172 = vmatprep.subr.mxu0 0.0
    %173 = vmatpush1.msra.mxu0 0.0
    %174 = vmatprep.subr.mxu0 0.0
    %175 = vmatpush1.msra.mxu0 0.0
    %176 = vmatprep.subr.mxu0 0.0
    %177 = vmatpush1.msra.mxu0 %v146
    %178 = vmatprep.subr.mxu0 0.0
    %179 = vmatpush1.msra.mxu0 %v145
    %180 = vmatprep.subr.mxu0 0.0
    %181 = vmatpush1.msra.mxu0 %v144
    %182 = vmatprep.subr.mxu0 0.0
    %183 = vmatpush1.msra.mxu0 %v143
    %184 = vmatprep.subr.mxu0 0.0
    %185 = vmatpush1.msra.mxu0 %v142
    %186 = vmatprep.subr.mxu0 0.0
    %187 = vmatpush1.msra.mxu0 %v141
    %188 = vmatprep.subr.mxu0 0.0
    %189 = vmatpush1.msra.mxu0 %v140
    %190 = vmatprep.subr.mxu0 0.0
    %191 = vmatpush1.msra.mxu0 %v139
    %192 = vmatprep.subr.mxu0 0.0
    %193 = vmatpush2.msra.mxu0 0.0
    %194 = vmatprep.subr.mxu0 0.0
    %195 = vmatpush2.msra.mxu0 0.0
    %196 = vmatprep.subr.mxu0 0.0
    %197 = vmatpush2.msra.mxu0 0.0
    %198 = vmatprep.subr.mxu0 0.0
    %199 = vmatpush2.msra.mxu0 0.0
    %200 = vmatprep.subr.mxu0 0.0
    %201 = vmatpush2.msra.mxu0 0.0
    %202 = vmatprep.subr.mxu0 0.0
    %203 = vmatpush2.msra.mxu0 0.0
    %204 = vmatprep.subr.mxu0 0.0
    %205 = vmatpush2.msra.mxu0 0.0
    %206 = vmatprep.subr.mxu0 0.0
    %207 = vmatpush2.msra.mxu0 0.0
    %208 = vmatprep.subr.mxu0 0.0
    %209 = vmatpush2.msra.mxu0 0.0
    %210 = vmatprep.subr.mxu0 0.0
    %211 = vmatpush2.msra.mxu0 0.0
    %212 = vmatprep.subr.mxu0 0.0
    %213 = vmatpush2.msra.mxu0 0.0
    %214 = vmatprep.subr.mxu0 0.0
    %215 = vmatpush2.msra.mxu0 0.0
    %216 = vmatprep.subr.mxu0 0.0
    %217 = vmatpush2.msra.mxu0 0.0
    %218 = vmatprep.subr.mxu0 0.0
    %219 = vmatpush2.msra.mxu0 0.0
    %220 = vmatprep.subr.mxu0 0.0
    %221 = vmatpush2.msra.mxu0 0.0
    %222 = vmatprep.subr.mxu0 0.0
    %223 = vmatpush2.msra.mxu0 0.0
    %224 = vmatprep.mubr.f32.mxu0 0.0
    %225 = vmatmul.mubr.f32.gmra.mxu0 %v155
    %v226 = vpop.f32.mrf.mxu0
    %v227 = vadd.f32 %v152, %v226
    %v228 = vpop.f32.mrf.mxu0
    %229 = vmatprep.mubr.f32.mxu0 0.0
    %230 = vmatmul.mubr.f32.gmra.mxu0 %v158
    %v231 = vpop.f32.mrf.mxu0
    %v232 = vadd.f32 %v152, %v231
    %v233 = vpop.f32.mrf.mxu0
    %234 = vdwg.mxu0
    %v235 = vld [vmem:[%s5] sm:$0xff]
    %v236 = vld [vmem:[%s5 + $0x8] sm:$0xff]
    %v237 = vld [vmem:[%s5 + $0x10] sm:$0xff]
    %v238 = vld [vmem:[%s5 + $0x18] sm:$0xff]
    %v239 = vld [vmem:[%s6] sm:$0x1]
    %v241 = vlaneseq
    %v242 = vshrl.u32 %v241, 7
    %v243 = vsub.s32 0, %v242
    %v244 = vrot.slane %v239, %v243
    %v247 = vsel %vm52, %v227, 0
    %v250 = vsel %vm52, %v232, 0
    %252 = vmatprep.subr.mxu0 0.0
    %253 = vmatpush1.msra.mxu0 0.0
    %254 = vmatprep.subr.mxu0 0.0
    %255 = vmatpush1.msra.mxu0 0.0
    %256 = vmatprep.subr.mxu0 0.0
    %257 = vmatpush1.msra.mxu0 0.0
    %258 = vmatprep.subr.mxu0 0.0
    %259 = vmatpush1.msra.mxu0 0.0
    %260 = vmatprep.subr.mxu0 0.0
    %261 = vmatpush1.msra.mxu0 0.0
    %262 = vmatprep.subr.mxu0 0.0
    %263 = vmatpush1.msra.mxu0 0.0
    %264 = vmatprep.subr.mxu0 0.0
    %265 = vmatpush1.msra.mxu0 0.0
    %266 = vmatprep.subr.mxu0 0.0
    %267 = vmatpush1.msra.mxu0 0.0
    %268 = vmatprep.subr.mxu0 0.0
    %269 = vmatpush1.msra.mxu0 0.0
    %270 = vmatprep.subr.mxu0 0.0
    %271 = vmatpush1.msra.mxu0 0.0
    %272 = vmatprep.subr.mxu0 0.0
    %273 = vmatpush1.msra.mxu0 0.0
    %274 = vmatprep.subr.mxu0 0.0
    %275 = vmatpush1.msra.mxu0 0.0
    %276 = vmatprep.subr.mxu0 0.0
    %277 = vmatpush1.msra.mxu0 %v238
    %278 = vmatprep.subr.mxu0 0.0
    %279 = vmatpush1.msra.mxu0 %v237
    %280 = vmatprep.subr.mxu0 0.0
    %281 = vmatpush1.msra.mxu0 %v236
    %282 = vmatprep.subr.mxu0 0.0
    %283 = vmatpush1.msra.mxu0 %v235
    %284 = vmatprep.subr.mxu0 0.0
    %285 = vmatpush2.msra.mxu0 0.0
    %286 = vmatprep.subr.mxu0 0.0
    %287 = vmatpush2.msra.mxu0 0.0
    %288 = vmatprep.subr.mxu0 0.0
    %289 = vmatpush2.msra.mxu0 0.0
    %290 = vmatprep.subr.mxu0 0.0
    %291 = vmatpush2.msra.mxu0 0.0
    %292 = vmatprep.subr.mxu0 0.0
    %293 = vmatpush2.msra.mxu0 0.0
    %294 = vmatprep.subr.mxu0 0.0
    %295 = vmatpush2.msra.mxu0 0.0
    %296 = vmatprep.subr.mxu0 0.0
    %297 = vmatpush2.msra.mxu0 0.0
    %298 = vmatprep.subr.mxu0 0.0
    %299 = vmatpush2.msra.mxu0 0.0
    %300 = vmatprep.subr.mxu0 0.0
    %301 = vmatpush2.msra.mxu0 0.0
    %302 = vmatprep.subr.mxu0 0.0
    %303 = vmatpush2.msra.mxu0 0.0
    %304 = vmatprep.subr.mxu0 0.0
    %305 = vmatpush2.msra.mxu0 0.0
    %306 = vmatprep.subr.mxu0 0.0
    %307 = vmatpush2.msra.mxu0 0.0
    %308 = vmatprep.subr.mxu0 0.0
    %309 = vmatpush2.msra.mxu0 0.0
    %310 = vmatprep.subr.mxu0 0.0
    %311 = vmatpush2.msra.mxu0 0.0
    %312 = vmatprep.subr.mxu0 0.0
    %313 = vmatpush2.msra.mxu0 0.0
    %314 = vmatprep.subr.mxu0 0.0
    %315 = vmatpush2.msra.mxu0 0.0
    %316 = vmatprep.mubr.f32.mxu0 0.0
    %317 = vmatmul.mubr.f32.gmra.mxu0 %v247
    %v318 = vpop.f32.mrf.mxu0
    %v319 = vadd.f32 %v244, %v318
    %v320 = vpop.f32.mrf.mxu0
    %321 = vmatprep.mubr.f32.mxu0 0.0
    %322 = vmatmul.mubr.f32.gmra.mxu0 %v250
    %v323 = vpop.f32.mrf.mxu0
    %v324 = vadd.f32 %v244, %v323
    %v325 = vpop.f32.mrf.mxu0
    %326 = vdwg.mxu0
    %v327 = vmax.f32 %v319, 0.0
    %v328 = vmax.f32 %v324, 0.0
    %v329 = vld [vmem:[%s7] sm:$0xff]
    %v330 = vld [vmem:[%s7 + $0x8] sm:$0xff]
    %v331 = vld [vmem:[%s7 + $0x10] sm:$0xff]
    %v332 = vld [vmem:[%s7 + $0x18] sm:$0xff]
    %v333 = vld [vmem:[%s7 + $0x20] sm:$0xff]
    %v334 = vld [vmem:[%s7 + $0x28] sm:$0xff]
    %v335 = vld [vmem:[%s7 + $0x30] sm:$0xff]
    %v336 = vld [vmem:[%s7 + $0x38] sm:$0xff]
    %v337 = vld [vmem:[%s7 + $0x40] sm:$0xff]
    %v338 = vld [vmem:[%s7 + $0x48] sm:$0xff]
    %v339 = vld [vmem:[%s7 + $0x50] sm:$0xff]
    %v340 = vld [vmem:[%s7 + $0x58] sm:$0xff]
    %v341 = vld [vmem:[%s7 + $0x60] sm:$0xff]
    %v342 = vld [vmem:[%s7 + $0x68] sm:$0xff]
    %v343 = vld [vmem:[%s7 + $0x70] sm:$0xff]
    %v344 = vld [vmem:[%s7 + $0x78] sm:$0xff]
    %v345 = vld [vmem:[%s8] sm:$0x1]
    %v347 = vlaneseq
    %v348 = vshrl.u32 %v347, 7
    %v349 = vsub.s32 0, %v348
    %v350 = vrot.slane %v345, %v349
    %352 = vmatprep.subr.mxu0 0.0
    %353 = vmatpush1.msra.mxu0 %v344
    %354 = vmatprep.subr.mxu0 0.0
    %355 = vmatpush1.msra.mxu0 %v343
    %356 = vmatprep.subr.mxu0 0.0
    %357 = vmatpush1.msra.mxu0 %v342
    %358 = vmatprep.subr.mxu0 0.0
    %359 = vmatpush1.msra.mxu0 %v341
    %360 = vmatprep.subr.mxu0 0.0
    %361 = vmatpush1.msra.mxu0 %v340
    %362 = vmatprep.subr.mxu0 0.0
    %363 = vmatpush1.msra.mxu0 %v339
    %364 = vmatprep.subr.mxu0 0.0
    %365 = vmatpush1.msra.mxu0 %v338
    %366 = vmatprep.subr.mxu0 0.0
    %367 = vmatpush1.msra.mxu0 %v337
    %368 = vmatprep.subr.mxu0 0.0
    %369 = vmatpush1.msra.mxu0 %v336
    %370 = vmatprep.subr.mxu0 0.0
    %371 = vmatpush1.msra.mxu0 %v335
    %372 = vmatprep.subr.mxu0 0.0
    %373 = vmatpush1.msra.mxu0 %v334
    %374 = vmatprep.subr.mxu0 0.0
    %375 = vmatpush1.msra.mxu0 %v333
    %376 = vmatprep.subr.mxu0 0.0
    %377 = vmatpush1.msra.mxu0 %v332
    %378 = vmatprep.subr.mxu0 0.0
    %379 = vmatpush1.msra.mxu0 %v331
    %380 = vmatprep.subr.mxu0 0.0
    %381 = vmatpush1.msra.mxu0 %v330
    %382 = vmatprep.subr.mxu0 0.0
    %383 = vmatpush1.msra.mxu0 %v329
    %384 = vmatprep.subr.mxu0 0.0
    %385 = vmatpush2.msra.mxu0 0.0
    %386 = vmatprep.subr.mxu0 0.0
    %387 = vmatpush2.msra.mxu0 0.0
    %388 = vmatprep.subr.mxu0 0.0
    %389 = vmatpush2.msra.mxu0 0.0
    %390 = vmatprep.subr.mxu0 0.0
    %391 = vmatpush2.msra.mxu0 0.0
    %392 = vmatprep.subr.mxu0 0.0
    %393 = vmatpush2.msra.mxu0 0.0
    %394 = vmatprep.subr.mxu0 0.0
    %395 = vmatpush2.msra.mxu0 0.0
    %396 = vmatprep.subr.mxu0 0.0
    %397 = vmatpush2.msra.mxu0 0.0
    %398 = vmatprep.subr.mxu0 0.0
    %399 = vmatpush2.msra.mxu0 0.0
    %400 = vmatprep.subr.mxu0 0.0
    %401 = vmatpush2.msra.mxu0 0.0
    %402 = vmatprep.subr.mxu0 0.0
    %403 = vmatpush2.msra.mxu0 0.0
    %404 = vmatprep.subr.mxu0 0.0
    %405 = vmatpush2.msra.mxu0 0.0
    %406 = vmatprep.subr.mxu0 0.0
    %407 = vmatpush2.msra.mxu0 0.0
    %408 = vmatprep.subr.mxu0 0.0
    %409 = vmatpush2.msra.mxu0 0.0
    %410 = vmatprep.subr.mxu0 0.0
    %411 = vmatpush2.msra.mxu0 0.0
    %412 = vmatprep.subr.mxu0 0.0
    %413 = vmatpush2.msra.mxu0 0.0
    %414 = vmatprep.subr.mxu0 0.0
    %415 = vmatpush2.msra.mxu0 0.0
    %416 = vmatprep.mubr.f32.mxu0 0.0
    %417 = vmatmul.mubr.f32.gmra.mxu0 %v327
    %v418 = vpop.f32.mrf.mxu0
    %v419 = vadd.f32 %v350, %v418
    %v420 = vpop.f32.mrf.mxu0
    %421 = vmatprep.mubr.f32.mxu0 0.0
    %422 = vmatmul.mubr.f32.gmra.mxu0 %v328
    %v423 = vpop.f32.mrf.mxu0
    %v424 = vadd.f32 %v350, %v423
    %v425 = vpop.f32.mrf.mxu0
    %426 = vdwg.mxu0
    %427 = vst.msk [vmem:[#allocation2] sm:$0xff] %vm52, %v419
    %428 = vst.msk [vmem:[#allocation2 + $0x8] sm:$0xff] %vm52, %v424
    %vm429 = vcmp.gt.f32.partialorder %v319, 0.0
    %vm430 = vcmp.gt.f32.partialorder %v324, 0.0
    %v431 = vsel %vm429, 1, 0
    %v432 = vsel %vm430, 1, 0
    %v433 = vcvt.s32.f32 %v431
    %v434 = vcvt.s32.f32 %v432
    %435 = vst [vmem:[#allocation4] sm:$0xff] %v433
    %436 = vst [vmem:[#allocation4 + $0x8] sm:$0xff] %v434
    %437 = vst [vmem:[#allocation6] sm:$0xff] %v319
    %438 = vst [vmem:[#allocation6 + $0x8] sm:$0xff] %v324
    // Predicated region
    $region38: #{tpu_custom_call.1} parent=1 // pred_check
      _
    $region39: #{tpu_custom_call.1} parent=1 // pred_check_branch
      %440 = sbr.rel (0) target = $region41
    $region40: #{tpu_custom_call.1} parent=1 // pred_region
      %s442 = ssub.s32 256, 256
      %443 = vsyncadd [#allocation3], %s442
      %s444 = sshll.u32 [#allocation2], 4
      %s445 = int_to_ptr.vmem [resolvable:$true] %s444
      %450 = dma.vmem_to_hbm [thread:$0]  %s445, 256, %s9, [#allocation3], 128, 128, 8
    $region41: #{tpu_custom_call.1} parent=1 // pred_fallthru
      _
    // Predicated region
    $region42: #{tpu_custom_call.1} parent=1 // pred_check
      _
    $region43: #{tpu_custom_call.1} parent=1 // pred_check_branch
      %452 = sbr.rel (0) target = $region45
    $region44: #{tpu_custom_call.1} parent=1 // pred_region
      %s454 = ssub.s32 256, 256
      %455 = vsyncadd [#allocation5], %s454
      %s456 = sshll.u32 [#allocation4], 4
      %s457 = int_to_ptr.vmem [resolvable:$true] %s456
      %462 = dma.vmem_to_hbm [thread:$0]  %s457, 256, %s10, [#allocation5], 128, 128, 8
    $region45: #{tpu_custom_call.1} parent=1 // pred_fallthru
      _
    // Predicated region
    $region46: #{tpu_custom_call.1} parent=1 // pred_check
      _
    $region47: #{tpu_custom_call.1} parent=1 // pred_check_branch
      %464 = sbr.rel (0) target = $region49
    $region48: #{tpu_custom_call.1} parent=1 // pred_region
      %s466 = ssub.s32 256, 256
      %467 = vsyncadd [#allocation5], %s466
      %s468 = sshll.u32 [#allocation6], 4
      %s469 = int_to_ptr.vmem [resolvable:$true] %s468
      %474 = dma.vmem_to_hbm [thread:$0]  %s469, 256, %s11, [#allocation5], 128, 128, 8
    $region49: #{tpu_custom_call.1} parent=1 // pred_fallthru
      _
    // Predicated region
    $region50: #{tpu_custom_call.1} parent=1 // pred_check
      _
    $region51: #{tpu_custom_call.1} parent=1 // pred_check_branch
      %476 = sbr.rel (0) target = $region53
    $region52: #{tpu_custom_call.1} parent=1 // pred_region
      %s478 = ssub.s32 256, 256
      %479 = vsyncadd [#allocation8], %s478
      %s480 = sshll.u32 [#allocation7], 4
      %s481 = int_to_ptr.vmem [resolvable:$true] %s480
      %486 = dma.vmem_to_hbm [thread:$0]  %s481, 256, %s12, [#allocation8], 128, 128, 8
    $region53: #{tpu_custom_call.1} parent=1 // pred_fallthru
      _
    // Predicated region
    $region54: #{tpu_custom_call.1} parent=1 // pred_check
      _
    $region55: #{tpu_custom_call.1} parent=1 // pred_check_branch
      %488 = sbr.rel (0) target = $region57
    $region56: #{tpu_custom_call.1} parent=1 // pred_region
      %489 = dma.done [#allocation3], 256
    $region57: #{tpu_custom_call.1} parent=1 // pred_fallthru
      _
    // Predicated region
    $region58: #{tpu_custom_call.1} parent=1 // pred_check
      _
    $region59: #{tpu_custom_call.1} parent=1 // pred_check_branch
      %491 = sbr.rel (0) target = $region61
    $region60: #{tpu_custom_call.1} parent=1 // pred_region
      %492 = dma.done [#allocation5], 256
    $region61: #{tpu_custom_call.1} parent=1 // pred_fallthru
      _
    // Predicated region
    $region62: #{tpu_custom_call.1} parent=1 // pred_check
      _
    $region63: #{tpu_custom_call.1} parent=1 // pred_check_branch
      %494 = sbr.rel (0) target = $region65
    $region64: #{tpu_custom_call.1} parent=1 // pred_region
      %495 = dma.done [#allocation5], 256
    $region65: #{tpu_custom_call.1} parent=1 // pred_fallthru
      _
    // Predicated region
    $region66: #{tpu_custom_call.1} parent=1 // pred_check
      _
    $region67: #{tpu_custom_call.1} parent=1 // pred_check_branch
      %497 = sbr.rel (0) target = $region69
    $region68: #{tpu_custom_call.1} parent=1 // pred_region
      %498 = dma.done [#allocation8], 256
    $region69: #{tpu_custom_call.1} parent=1 // pred_fallthru
      _
    %499 = vsyncpa [#allocation3], 1
    %500 = vsyncpa [#allocation5], 1
    %501 = vsyncpa [#allocation8], 1

</llo_original>
